<compile_context>
chip_gen: v6e
topology: v6e:2x2x1
jax: 0.10.0
libtpu: 0.0.40
codegen_flags: <defaults>
</compile_context>

<pallas_src>
import functools

import jax
import jax.numpy as jnp
from jax.experimental import pallas as pl
from jax.experimental.pallas import tpu as pltpu


def _round_up(v, m):
    return ((v + m - 1) // m) * m


def _ffn_kernel(x_ref, w1_ref, b1_ref, w2_ref, b2_ref, g_ref, beta_ref,
                o_ref, acc_ref, *, emb_size, eps, add_norm, compute_dtype):
    k = pl.program_id(1)
    nk = pl.num_programs(1)

    @pl.when(k == 0)
    def _():
        acc_ref[...] = jnp.zeros_like(acc_ref)

    # x stays in its original dtype for the residual; cast only the MXU operand.
    x = x_ref[...]
    xc = x.astype(compute_dtype)

    # Linear(emb, hidden_tile) -> ReLU  (bf16 MXU operands, f32 accumulate)
    h = jnp.dot(xc, w1_ref[...], preferred_element_type=jnp.float32) + b1_ref[...]
    h = jnp.maximum(h, 0.0)
    # (nn.Dropout: identity in eval mode)

    # Partial Linear(hidden_tile, emb), accumulated over the hidden grid axis.
    acc_ref[...] += jnp.dot(h.astype(compute_dtype), w2_ref[...],
                            preferred_element_type=jnp.float32)

    @pl.when(k == nk - 1)
    def _():
        y = acc_ref[...] + b2_ref[...]
        # (nn.Dropout: identity in eval mode)
        if add_norm:
            z = x.astype(jnp.float32) + y
            e_pad = z.shape[-1]
            if e_pad != emb_size:
                # Zero padded lanes so mean/var only see the real features
                # (robust even if padded params were ever non-zero).
                lane = jax.lax.broadcasted_iota(jnp.int32, z.shape, 1)
                z = jnp.where(lane < emb_size, z, 0.0)
            inv_n = jnp.float32(1.0 / emb_size)
            mu = jnp.sum(z, axis=-1, keepdims=True) * inv_n
            zc = z - mu
            if e_pad != emb_size:
                lane = jax.lax.broadcasted_iota(jnp.int32, z.shape, 1)
                zc = jnp.where(lane < emb_size, zc, 0.0)
            var = jnp.sum(zc * zc, axis=-1, keepdims=True) * inv_n
            inv = jax.lax.rsqrt(var + jnp.float32(eps))
            out = zc * inv * g_ref[...] + beta_ref[...]
            o_ref[...] = out.astype(o_ref.dtype)
        else:
            o_ref[...] = y.astype(o_ref.dtype)


def prepare_ffn_params(w1, b1, w2, b2, gamma, beta, *,
                       compute_dtype=jnp.bfloat16, tk_h=512):
    """Pad + cast the weight-stationary params ONCE (cache the result).

    w1: (emb, hidden)  b1: (hidden,)
    w2: (hidden, emb)  b2: (emb,)
    gamma, beta: (emb,)
    """
    emb, hidden = w1.shape
    e_p = _round_up(emb, 128)
    tk = min(tk_h, _round_up(hidden, 128))
    h_p = _round_up(hidden, tk)
    f32 = jnp.float32

    w1_p = jnp.zeros((e_p, h_p), compute_dtype).at[:emb, :hidden].set(
        w1.astype(compute_dtype))
    w2_p = jnp.zeros((h_p, e_p), compute_dtype).at[:hidden, :emb].set(
        w2.astype(compute_dtype))
    b1_p = jnp.zeros((1, h_p), f32).at[0, :hidden].set(b1.astype(f32))
    b2_p = jnp.zeros((1, e_p), f32).at[0, :emb].set(b2.astype(f32))
    g_p = jnp.zeros((1, e_p), f32).at[0, :emb].set(gamma.astype(f32))
    be_p = jnp.zeros((1, e_p), f32).at[0, :emb].set(beta.astype(f32))

    return dict(w1=w1_p, b1=b1_p, w2=w2_p, b2=b2_p, gamma=g_p, beta=be_p,
                emb=emb, hidden=hidden, e_p=e_p, h_p=h_p, tk_h=tk,
                compute_dtype=compute_dtype)


def feed_forward_forward(x, params, *, eps=1e-5, add_norm=True,
                         tm=None, out_dtype=None):
    """FeedForward forward pass (eval mode), params from prepare_ffn_params."""
    emb = params["emb"]
    hidden = params["hidden"]
    e_p, h_p, tk_h = params["e_p"], params["h_p"], params["tk_h"]
    compute_dtype = params["compute_dtype"]

    orig_shape = x.shape
    assert orig_shape[-1] == emb
    x2 = x.reshape(-1, emb)
    n = x2.shape[0]

    if tm is None:
        # 256 is safe across v5e/v6e/v7x; bump to 512 on v6e for large n.
        tm = 256 if n >= 256 else _round_up(max(n, 8), 8)
    n_p = _round_up(n, tm)
    out_dtype = x.dtype if out_dtype is None else out_dtype

    # Fast path: skip activation padding when already (8,128)-aligned.
    aligned = (n_p == n) and (e_p == emb)
    if aligned:
        x_p = x2
    else:
        x_p = jnp.zeros((n_p, e_p), x.dtype).at[:n, :emb].set(x2)

    grid = (n_p // tm, h_p // tk_h)
    kernel = functools.partial(_ffn_kernel, emb_size=emb, eps=eps,
                               add_norm=add_norm, compute_dtype=compute_dtype)

    # Explicit VMEM budget (double-buffered tiles + f32 accumulator), with
    # headroom, capped at v7x's 64 MiB per-core limit.
    x_b = jnp.dtype(x.dtype).itemsize
    w_b = jnp.dtype(compute_dtype).itemsize
    o_b = jnp.dtype(out_dtype).itemsize
    vmem_need = (2 * tm * e_p * x_b          # x tile
                 + 2 * e_p * tk_h * w_b      # W1 slice
                 + 2 * tk_h * e_p * w_b      # W2 slice
                 + 2 * 8 * tk_h * 4          # b1 slice (padded sublanes)
                 + 2 * 3 * 8 * e_p * 4       # b2, gamma, beta
                 + 2 * tm * e_p * o_b        # output tile
                 + tm * e_p * 4)             # f32 accumulator scratch
    vmem_limit = min(max(int(vmem_need * 3 // 2) + (4 << 20), 16 << 20), 64 << 20)

    cost = pl.CostEstimate(
        flops=4 * n_p * emb * hidden,
        transcendentals=n_p,
        bytes_accessed=(n_p * e_p * (x_b + o_b)
                        + 2 * e_p * h_p * w_b
                        + (5 * e_p + h_p) * 4))

    grid_spec = pltpu.PrefetchScalarGridSpec(
        num_scalar_prefetch=0,
        grid=grid,
        in_specs=[
            pl.BlockSpec((tm, e_p), lambda i, k: (i, 0)),     # x (reused across k)
            pl.BlockSpec((e_p, tk_h), lambda i, k: (0, k)),   # W1 slice (streamed)
            pl.BlockSpec((1, tk_h), lambda i, k: (0, k)),     # b1 slice
            pl.BlockSpec((tk_h, e_p), lambda i, k: (k, 0)),   # W2 slice (streamed)
            pl.BlockSpec((1, e_p), lambda i, k: (0, 0)),      # b2
            pl.BlockSpec((1, e_p), lambda i, k: (0, 0)),      # gamma
            pl.BlockSpec((1, e_p), lambda i, k: (0, 0)),      # beta
        ],
        out_specs=pl.BlockSpec((tm, e_p), lambda i, k: (i, 0)),
        scratch_shapes=[pltpu.VMEM((tm, e_p), jnp.float32)],
    )

    out_p = pl.pallas_call(
        kernel,
        out_shape=jax.ShapeDtypeStruct((n_p, e_p), out_dtype),
        grid_spec=grid_spec,
        compiler_params=pltpu.CompilerParams(
            dimension_semantics=("parallel", "arbitrary"),
            vmem_limit_bytes=vmem_limit,
        ),
        cost_estimate=cost,
    )(x_p, params["w1"], params["b1"], params["w2"], params["b2"],
      params["gamma"], params["beta"])

    out = out_p if aligned else out_p[:n, :emb]
    return out.reshape(orig_shape)


def feed_forward(x, w1, b1, w2, b2, gamma, beta, *, eps=1e-5, add_norm=True,
                 compute_dtype=jnp.bfloat16, tm=None, out_dtype=None):
    """Convenience wrapper (pads/casts params per call; prefer prepare_ffn_params)."""
    params = prepare_ffn_params(w1, b1, w2, b2, gamma, beta,
                                compute_dtype=compute_dtype)
    return feed_forward_forward(x, params, eps=eps, add_norm=add_norm,
                                tm=tm, out_dtype=out_dtype)


def feed_forward_reference(x, w1, b1, w2, b2, gamma, beta, *, eps=1e-5, add_norm=True):
    """Pure-JAX reference matching the PyTorch forward (eval mode)."""
    h = jnp.maximum(x @ w1 + b1, 0.0)
    y = h @ w2 + b2
    if not add_norm:
        return y
    z = x + y
    mu = jnp.mean(z, axis=-1, keepdims=True)
    var = jnp.mean((z - mu) ** 2, axis=-1, keepdims=True)
    return (z - mu) / jnp.sqrt(var + eps) * gamma + beta


if __name__ == "__main__":
    # Small shapes consistent with the module.
    batch, seq, emb_size, hidden_size = 2, 8, 32, 64

    key = jax.random.PRNGKey(0)
    k_x, k_w1, k_b1, k_w2, k_b2, k_g, k_b = jax.random.split(key, 7)

    x = jax.random.normal(k_x, (batch, seq, emb_size), dtype=jnp.float32)
    # Parameters (JAX layout: Linear weight is (in, out); semantics match nn.Linear).
    w1 = jax.random.normal(k_w1, (emb_size, hidden_size), jnp.float32) * 0.1
    b1 = jax.random.normal(k_b1, (hidden_size,), jnp.float32) * 0.1
    w2 = jax.random.normal(k_w2, (hidden_size, emb_size), jnp.float32) * 0.1
    b2 = jax.random.normal(k_b2, (emb_size,), jnp.float32) * 0.1
    gamma = 1.0 + 0.1 * jax.random.normal(k_g, (emb_size,), jnp.float32)
    beta = 0.1 * jax.random.normal(k_b, (emb_size,), jnp.float32)

    ref = feed_forward_reference(x, w1, b1, w2, b2, gamma, beta)
    ref_no_norm = feed_forward_reference(x, w1, b1, w2, b2, gamma, beta,
                                         add_norm=False)

    # --- f32 compute path: strict correctness check ---
    params_f32 = prepare_ffn_params(w1, b1, w2, b2, gamma, beta,
                                    compute_dtype=jnp.float32)
    out_f32 = jax.block_until_ready(feed_forward_forward(x, params_f32))
    assert out_f32.shape == x.shape
    assert jnp.allclose(out_f32, ref, atol=1e-4, rtol=1e-4), "f32 path mismatch"

    out_f32_nn = jax.block_until_ready(
        feed_forward_forward(x, params_f32, add_norm=False))
    assert jnp.allclose(out_f32_nn, ref_no_norm, atol=1e-4, rtol=1e-4), \
        "f32 no-norm path mismatch"

    # --- default bf16 MXU path: looser tolerance (bf16 operand rounding) ---
    params_bf16 = prepare_ffn_params(w1, b1, w2, b2, gamma, beta,
                                     compute_dtype=jnp.bfloat16)
    out_bf16 = jax.block_until_ready(feed_forward_forward(x, params_bf16))
    assert out_bf16.shape == x.shape
    assert jnp.allclose(out_bf16, ref, atol=2e-2, rtol=2e-2), "bf16 path mismatch"

    print("KERNEL_OK")
</pallas_src>

<mosaic_0001>
module attributes {stable_mosaic.version = 11 : i64} {
  func.func @_ffn_kernel(%arg0: i32, %arg1: i32, %arg2: memref<16x128xf32, #tpu.memory_space<vmem>>, %arg3: memref<128x128xf32, #tpu.memory_space<vmem>>, %arg4: memref<1x128xf32, #tpu.memory_space<vmem>>, %arg5: memref<128x128xf32, #tpu.memory_space<vmem>>, %arg6: memref<1x128xf32, #tpu.memory_space<vmem>>, %arg7: memref<1x128xf32, #tpu.memory_space<vmem>>, %arg8: memref<1x128xf32, #tpu.memory_space<vmem>>, %arg9: memref<16x128xf32, #tpu.memory_space<vmem>>, %arg10: memref<16x128xf32, #tpu.memory_space<vmem>>) attributes {dimension_semantics = [#tpu.dimension_semantics<parallel>, #tpu.dimension_semantics<arbitrary>], iteration_bounds = array<i64: 1, 1>, scalar_prefetch = 0 : i64, scratch_operands = 1 : i64, tpu.core_type = #tpu.core_type<tc>, window_params = [{transform_indices = @transform_0, window_bounds = array<i64: 16, 128>}, {transform_indices = @transform_1, window_bounds = array<i64: 128, 128>}, {transform_indices = @transform_2, window_bounds = array<i64: 1, 128>}, {transform_indices = @transform_3, window_bounds = array<i64: 128, 128>}, {pipeline_mode = #tpu.pipeline_mode<synchronous>, transform_indices = @transform_4, window_bounds = array<i64: 1, 128>}, {pipeline_mode = #tpu.pipeline_mode<synchronous>, transform_indices = @transform_5, window_bounds = array<i64: 1, 128>}, {pipeline_mode = #tpu.pipeline_mode<synchronous>, transform_indices = @transform_6, window_bounds = array<i64: 1, 128>}, {transform_indices = @transform_7, window_bounds = array<i64: 16, 128>}]} {
    %c0_i32 = arith.constant 0 : i32
    %0 = arith.cmpi eq, %arg1, %c0_i32 : i32
    %1 = arith.extui %0 : i1 to i32
    %c0_i32_0 = arith.constant 0 : i32
    %2 = arith.cmpi ne, %1, %c0_i32_0 : i32
    scf.if %2 {
      %cst_16 = arith.constant 0.000000e+00 : f32
      %19 = vector.broadcast %cst_16 : f32 to vector<16x128xf32>
      %c0_17 = arith.constant 0 : index
      %c0_18 = arith.constant 0 : index
      %20 = vector.load %arg10[%c0_17, %c0_18] : memref<16x128xf32, #tpu.memory_space<vmem>>, vector<16x128xf32>
      tpu.vector_store %arg10[%c0_17, %c0_18], %19 {strides = array<i32>} : memref<16x128xf32, #tpu.memory_space<vmem>>, vector<16x128xf32>,
    } else {
    }
    %c0 = arith.constant 0 : index
    %c0_1 = arith.constant 0 : index
    %3 = vector.load %arg2[%c0, %c0_1] : memref<16x128xf32, #tpu.memory_space<vmem>>, vector<16x128xf32>
    %c0_2 = arith.constant 0 : index
    %c0_3 = arith.constant 0 : index
    %4 = vector.load %arg3[%c0_2, %c0_3] : memref<128x128xf32, #tpu.memory_space<vmem>>, vector<128x128xf32>
    %cst = arith.constant dense<0.000000e+00> : vector<16x128xf32>
    %5 = tpu.matmul %3, %4, %cst {dimension_numbers = #tpu.dot_dimension_numbers<[1], [0], [0], [1], [0, 0, 1, 1], [], []>} : vector<16x128xf32>, vector<128x128xf32>, vector<16x128xf32> -> vector<16x128xf32>
    %c0_4 = arith.constant 0 : index
    %c0_5 = arith.constant 0 : index
    %6 = vector.load %arg4[%c0_4, %c0_5] : memref<1x128xf32, #tpu.memory_space<vmem>>, vector<1x128xf32>
    %7 = vector.broadcast %6 : vector<1x128xf32> to vector<16x128xf32>
    %8 = arith.addf %5, %7 : vector<16x128xf32>
    %cst_6 = arith.constant 0.000000e+00 : f32
    %9 = vector.broadcast %cst_6 : f32 to vector<16x128xf32>
    %10 = arith.maximumf %8, %9 : vector<16x128xf32>
    %c0_7 = arith.constant 0 : index
    %c0_8 = arith.constant 0 : index
    %11 = vector.load %arg10[%c0_7, %c0_8] : memref<16x128xf32, #tpu.memory_space<vmem>>, vector<16x128xf32>
    %c0_9 = arith.constant 0 : index
    %c0_10 = arith.constant 0 : index
    %12 = vector.load %arg5[%c0_9, %c0_10] : memref<128x128xf32, #tpu.memory_space<vmem>>, vector<128x128xf32>
    %cst_11 = arith.constant dense<0.000000e+00> : vector<16x128xf32>
    %13 = tpu.matmul %10, %12, %cst_11 {dimension_numbers = #tpu.dot_dimension_numbers<[1], [0], [0], [1], [0, 0, 1, 1], [], []>} : vector<16x128xf32>, vector<128x128xf32>, vector<16x128xf32> -> vector<16x128xf32>
    %14 = arith.addf %11, %13 : vector<16x128xf32>
    %c0_12 = arith.constant 0 : index
    %c0_13 = arith.constant 0 : index
    %15 = vector.load %arg10[%c0_12, %c0_13] : memref<16x128xf32, #tpu.memory_space<vmem>>, vector<16x128xf32>
    tpu.vector_store %arg10[%c0_12, %c0_13], %14 {strides = array<i32>} : memref<16x128xf32, #tpu.memory_space<vmem>>, vector<16x128xf32>,
    %c0_i32_14 = arith.constant 0 : i32
    %16 = arith.cmpi eq, %arg1, %c0_i32_14 : i32
    %17 = arith.extui %16 : i1 to i32
    %c0_i32_15 = arith.constant 0 : i32
    %18 = arith.cmpi ne, %17, %c0_i32_15 : i32
    scf.if %18 {
      %c0_16 = arith.constant 0 : index
      %c0_17 = arith.constant 0 : index
      %19 = vector.load %arg10[%c0_16, %c0_17] : memref<16x128xf32, #tpu.memory_space<vmem>>, vector<16x128xf32>
      %c0_18 = arith.constant 0 : index
      %c0_19 = arith.constant 0 : index
      %20 = vector.load %arg6[%c0_18, %c0_19] : memref<1x128xf32, #tpu.memory_space<vmem>>, vector<1x128xf32>
      %21 = vector.broadcast %20 : vector<1x128xf32> to vector<16x128xf32>
      %22 = arith.addf %19, %21 : vector<16x128xf32>
      %23 = arith.addf %3, %22 : vector<16x128xf32>
      %24 = tpu.iota {dimensions = array<i32: 1>} : vector<16x128xi32>
      %c32_i32 = arith.constant 32 : i32
      %25 = vector.broadcast %c32_i32 : i32 to vector<16x128xi32>
      %26 = arith.cmpi slt, %24, %25 : vector<16x128xi32>
      %cst_20 = arith.constant 0.000000e+00 : f32
      %27 = vector.broadcast %cst_20 : f32 to vector<16x128xf32>
      %28 = arith.select %26, %23, %27 : vector<16x128xi1>, vector<16x128xf32>
      %cst_21 = arith.constant dense<0.000000e+00> : vector<16xf32>
      %29 = vector.multi_reduction <add>, %28, %cst_21 [1] : vector<16x128xf32> to vector<16xf32>
      %30 = vector.shape_cast %29 : vector<16xf32> to vector<16x1xf32>
      %cst_22 = arith.constant 3.125000e-02 : f32
      %31 = vector.broadcast %cst_22 : f32 to vector<16x1xf32>
      %32 = arith.mulf %30, %31 : vector<16x1xf32>
      %33 = vector.broadcast %32 : vector<16x1xf32> to vector<16x128xf32>
      %34 = arith.subf %28, %33 : vector<16x128xf32>
      %35 = tpu.iota {dimensions = array<i32: 1>} : vector<16x128xi32>
      %c32_i32_23 = arith.constant 32 : i32
      %36 = vector.broadcast %c32_i32_23 : i32 to vector<16x128xi32>
      %37 = arith.cmpi slt, %35, %36 : vector<16x128xi32>
      %cst_24 = arith.constant 0.000000e+00 : f32
      %38 = vector.broadcast %cst_24 : f32 to vector<16x128xf32>
      %39 = arith.select %37, %34, %38 : vector<16x128xi1>, vector<16x128xf32>
      %40 = arith.mulf %39, %39 : vector<16x128xf32>
      %cst_25 = arith.constant dense<0.000000e+00> : vector<16xf32>
      %41 = vector.multi_reduction <add>, %40, %cst_25 [1] : vector<16x128xf32> to vector<16xf32>
      %42 = vector.shape_cast %41 : vector<16xf32> to vector<16x1xf32>
      %cst_26 = arith.constant 3.125000e-02 : f32
      %43 = vector.broadcast %cst_26 : f32 to vector<16x1xf32>
      %44 = arith.mulf %42, %43 : vector<16x1xf32>
      %cst_27 = arith.constant 9.99999974E-6 : f32
      %45 = vector.broadcast %cst_27 : f32 to vector<16x1xf32>
      %46 = arith.addf %44, %45 : vector<16x1xf32>
      %47 = math.rsqrt %46 : vector<16x1xf32>
      %48 = vector.broadcast %47 : vector<16x1xf32> to vector<16x128xf32>
      %49 = arith.mulf %39, %48 : vector<16x128xf32>
      %c0_28 = arith.constant 0 : index
      %c0_29 = arith.constant 0 : index
      %50 = vector.load %arg7[%c0_28, %c0_29] : memref<1x128xf32, #tpu.memory_space<vmem>>, vector<1x128xf32>
      %51 = vector.broadcast %50 : vector<1x128xf32> to vector<16x128xf32>
      %52 = arith.mulf %49, %51 : vector<16x128xf32>
      %c0_30 = arith.constant 0 : index
      %c0_31 = arith.constant 0 : index
      %53 = vector.load %arg8[%c0_30, %c0_31] : memref<1x128xf32, #tpu.memory_space<vmem>>, vector<1x128xf32>
      %54 = vector.broadcast %53 : vector<1x128xf32> to vector<16x128xf32>
      %55 = arith.addf %52, %54 : vector<16x128xf32>
      %c0_32 = arith.constant 0 : index
      %c0_33 = arith.constant 0 : index
      %56 = vector.load %arg9[%c0_32, %c0_33] : memref<16x128xf32, #tpu.memory_space<vmem>>, vector<16x128xf32>
      tpu.vector_store %arg9[%c0_32, %c0_33], %55 {strides = array<i32>} : memref<16x128xf32, #tpu.memory_space<vmem>>, vector<16x128xf32>,
    } else {
    }
    return
  }
  func.func @transform_0(%arg0: i32, %arg1: i32) -> (i32, i32) {
    %c0_i32 = arith.constant 0 : i32
    %c0_i32_0 = arith.constant 0 : i32
    return %arg0, %c0_i32 : i32, i32
  }
  func.func @transform_1(%arg0: i32, %arg1: i32) -> (i32, i32) {
    %c0_i32 = arith.constant 0 : i32
    %c0_i32_0 = arith.constant 0 : i32
    return %c0_i32, %arg1 : i32, i32
  }
  func.func @transform_2(%arg0: i32, %arg1: i32) -> (i32, i32) {
    %c0_i32 = arith.constant 0 : i32
    %c0_i32_0 = arith.constant 0 : i32
    return %c0_i32, %arg1 : i32, i32
  }
  func.func @transform_3(%arg0: i32, %arg1: i32) -> (i32, i32) {
    %c0_i32 = arith.constant 0 : i32
    %c0_i32_0 = arith.constant 0 : i32
    return %arg1, %c0_i32 : i32, i32
  }
  func.func @transform_4(%arg0: i32, %arg1: i32) -> (i32, i32) {
    %c0_i32 = arith.constant 0 : i32
    %c0_i32_0 = arith.constant 0 : i32
    %c0_i32_1 = arith.constant 0 : i32
    return %c0_i32, %c0_i32_0 : i32, i32
  }
  func.func @transform_5(%arg0: i32, %arg1: i32) -> (i32, i32) {
    %c0_i32 = arith.constant 0 : i32
    %c0_i32_0 = arith.constant 0 : i32
    %c0_i32_1 = arith.constant 0 : i32
    return %c0_i32, %c0_i32_0 : i32, i32
  }
  func.func @transform_6(%arg0: i32, %arg1: i32) -> (i32, i32) {
    %c0_i32 = arith.constant 0 : i32
    %c0_i32_0 = arith.constant 0 : i32
    %c0_i32_1 = arith.constant 0 : i32
    return %c0_i32, %c0_i32_0 : i32, i32
  }
  func.func @transform_7(%arg0: i32, %arg1: i32) -> (i32, i32) {
    %c0_i32 = arith.constant 0 : i32
    %c0_i32_0 = arith.constant 0 : i32
    return %arg0, %c0_i32 : i32, i32
  }
}

</mosaic_0001>

<llo_original>
// kernel: tpu_custom_call.1
$region0: #{tpu_custom_call.1}
  #allocation0 [shape = 'u32[]', space=smem, size = 0x4, offset = 0x4, fixed_abs, tag = 'smem constant byte address 0x4 - core index']
  #allocation1 [shape = 'u32[144,128]{1,0:T(1,128)}', space=vmem, size = 0x12000, scoped, tag = 'internal scratch']
  #allocation2 [shape = 'f32[16,128]{1,0:T(8,128)}', space=vmem, size = 0x2000, scoped, tag = 'scratch operand']
  %s0 = inlined_call_operand.hbm [shape: f32[16,128], index: 0, kind: input, shape index: {}]
  %s1 = inlined_call_operand.hbm [shape: f32[128,128], index: 1, kind: input, shape index: {}]
  %s2 = inlined_call_operand.vmem [shape: f32[1,128], index: 2, kind: input, shape index: {}]
  %s3 = inlined_call_operand.hbm [shape: f32[128,128], index: 3, kind: input, shape index: {}]
  %s4 = inlined_call_operand.vmem [shape: f32[1,128], index: 4, kind: input, shape index: {}]
  %s5 = inlined_call_operand.vmem [shape: f32[1,128], index: 5, kind: input, shape index: {}]
  %s6 = inlined_call_operand.vmem [shape: f32[1,128], index: 6, kind: input, shape index: {}]
  %s7 = inlined_call_operand.hbm [shape: f32[16,128], index: 7, kind: output, shape index: {}]
  %s8 = sld [smem:[#allocation0]]
  $region58: #{tpu_custom_call.1} parent=0
    _
  %s10 = ssub.s32 1, %s8
  %s11 = scalar_select 0, %s10, %s8
  $region1: #{tpu_custom_call.1} parent=0
    #allocation3 [shape = 'u8[8192]{0}', space=vmem, size = 0x2000, scoped, tag = 'input window, operand 0, single buffered']
    #allocation4 [shape = 's32[1]{0}', space=sflag, size = 0x4, scoped, tag = 'scoped memory for tpu_custom_call.1']
    #allocation5 [shape = 's32[1]{0}', space=sflag, size = 0x4, scoped, tag = 'scoped memory for tpu_custom_call.1']
    #allocation6 [shape = 'u8[65536]{0}', space=vmem, size = 0x10000, scoped, tag = 'input window, operand 1, single buffered']
    #allocation7 [shape = 's32[1]{0}', space=sflag, size = 0x4, scoped, tag = 'scoped memory for tpu_custom_call.1']
    #allocation8 [shape = 'u8[65536]{0}', space=vmem, size = 0x10000, scoped, tag = 'input window, operand 3, single buffered']
    #allocation9 [shape = 'u8[8192]{0}', space=vmem, size = 0x2000, scoped, tag = 'output window, operand 0, single buffered']
    %12 = vsyncpa [#allocation4], 0
    %13 = vsyncpa [#allocation7], 0
    %14 = vsyncpa [#allocation5], 0
    // Predicated region
    $region2: #{tpu_custom_call.1} parent=1 // pred_check
      _
    $region3: #{tpu_custom_call.1} parent=1 // pred_check_branch
      %16 = sbr.rel (0) target = $region5
    $region4: #{tpu_custom_call.1} parent=1 // pred_region
      %s18 = ssub.s32 256, 256
      %19 = vsyncadd [#allocation4], %s18
      %s20 = sshll.u32 [#allocation3], 4
      %s21 = int_to_ptr.vmem [resolvable:$true] %s20
      %26 = dma.hbm_to_vmem [thread:$0]  %s0, 256, %s21, [#allocation4], 128, 128, 8
    $region5: #{tpu_custom_call.1} parent=1 // pred_fallthru
      _
    // Predicated region
    $region6: #{tpu_custom_call.1} parent=1 // pred_check
      _
    $region7: #{tpu_custom_call.1} parent=1 // pred_check_branch
      %28 = sbr.rel (0) target = $region9
    $region8: #{tpu_custom_call.1} parent=1 // pred_region
      %s30 = ssub.s32 2048, 2048
      %31 = vsyncadd [#allocation7], %s30
      %s32 = sshll.u32 [#allocation6], 4
      %s33 = int_to_ptr.vmem [resolvable:$true] %s32
      %38 = dma.hbm_to_vmem [thread:$0]  %s1, 2048, %s33, [#allocation7], 128, 128, 8
    $region9: #{tpu_custom_call.1} parent=1 // pred_fallthru
      _
    // Predicated region
    $region10: #{tpu_custom_call.1} parent=1 // pred_check
      _
    $region11: #{tpu_custom_call.1} parent=1 // pred_check_branch
      %40 = sbr.rel (0) target = $region13
    $region12: #{tpu_custom_call.1} parent=1 // pred_region
      _
    $region13: #{tpu_custom_call.1} parent=1 // pred_fallthru
      _
    // Predicated region
    $region14: #{tpu_custom_call.1} parent=1 // pred_check
      _
    $region15: #{tpu_custom_call.1} parent=1 // pred_check_branch
      %42 = sbr.rel (0) target = $region17
    $region16: #{tpu_custom_call.1} parent=1 // pred_region
      %s44 = ssub.s32 2048, 2048
      %45 = vsyncadd [#allocation7], %s44
      %s46 = sshll.u32 [#allocation8], 4
      %s47 = int_to_ptr.vmem [resolvable:$true] %s46
      %52 = dma.hbm_to_vmem [thread:$0]  %s3, 2048, %s47, [#allocation7], 128, 128, 8
    $region17: #{tpu_custom_call.1} parent=1 // pred_fallthru
      _
    // Predicated region
    $region18: #{tpu_custom_call.1} parent=1 // pred_check
      _
    $region19: #{tpu_custom_call.1} parent=1 // pred_check_branch
      %54 = sbr.rel (0) target = $region21
    $region20: #{tpu_custom_call.1} parent=1 // pred_region
      _
    $region21: #{tpu_custom_call.1} parent=1 // pred_fallthru
      _
    // Predicated region
    $region22: #{tpu_custom_call.1} parent=1 // pred_check
      _
    $region23: #{tpu_custom_call.1} parent=1 // pred_check_branch
      %56 = sbr.rel (0) target = $region25
    $region24: #{tpu_custom_call.1} parent=1 // pred_region
      _
    $region25: #{tpu_custom_call.1} parent=1 // pred_fallthru
      _
    // Predicated region
    $region26: #{tpu_custom_call.1} parent=1 // pred_check
      _
    $region27: #{tpu_custom_call.1} parent=1 // pred_check_branch
      %58 = sbr.rel (0) target = $region29
    $region28: #{tpu_custom_call.1} parent=1 // pred_region
      _
    $region29: #{tpu_custom_call.1} parent=1 // pred_fallthru
      _
    // Predicated region
    $region30: #{tpu_custom_call.1} parent=1 // pred_check
      _
    $region31: #{tpu_custom_call.1} parent=1 // pred_check_branch
      %60 = sbr.rel (0) target = $region33
    $region32: #{tpu_custom_call.1} parent=1 // pred_region
      %61 = dma.done [#allocation4], 256
    $region33: #{tpu_custom_call.1} parent=1 // pred_fallthru
      _
    // Predicated region
    $region34: #{tpu_custom_call.1} parent=1 // pred_check
      _
    $region35: #{tpu_custom_call.1} parent=1 // pred_check_branch
      %63 = sbr.rel (0) target = $region37
    $region36: #{tpu_custom_call.1} parent=1 // pred_region
      %64 = dma.done [#allocation7], 2048
    $region37: #{tpu_custom_call.1} parent=1 // pred_fallthru
      _
    // Predicated region
    $region38: #{tpu_custom_call.1} parent=1 // pred_check
      _
    $region39: #{tpu_custom_call.1} parent=1 // pred_check_branch
      %66 = sbr.rel (0) target = $region41
    $region40: #{tpu_custom_call.1} parent=1 // pred_region
      %67 = dma.done [#allocation7], 2048
    $region41: #{tpu_custom_call.1} parent=1 // pred_fallthru
      _
    %p68 = scmp.eq.s32.totalorder 0, 0
    // Predicated region
    $region42: #{tpu_custom_call.1} parent=1 // pred_check
      %p69 = pneg %p68
    $region43: #{tpu_custom_call.1} parent=1 // pred_check_branch
      %71 = sbr.rel (%p69) target = $region45
    $region44: #{tpu_custom_call.1} parent=1 // pred_region
      %72 = vst [vmem:[#allocation2] sm:$0xff] 0.0
      %73 = vst [vmem:[#allocation2 + $0x8] sm:$0xff] 0.0
    $region45: #{tpu_custom_call.1} parent=1 // pred_fallthru
      _
    %v74 = vld [vmem:[#allocation3] sm:$0xff]
    %v75 = vld [vmem:[#allocation3 + $0x8] sm:$0xff]
    %v76 = vld [vmem:[#allocation6] sm:$0xff]
    %v77 = vld [vmem:[#allocation6 + $0x8] sm:$0xff]
    %v78 = vld [vmem:[#allocation6 + $0x10] sm:$0xff]
    %v79 = vld [vmem:[#allocation6 + $0x18] sm:$0xff]
    %v80 = vld [vmem:[#allocation6 + $0x20] sm:$0xff]
    %v81 = vld [vmem:[#allocation6 + $0x28] sm:$0xff]
    %v82 = vld [vmem:[#allocation6 + $0x30] sm:$0xff]
    %v83 = vld [vmem:[#allocation6 + $0x38] sm:$0xff]
    %v84 = vld [vmem:[#allocation6 + $0x40] sm:$0xff]
    %v85 = vld [vmem:[#allocation6 + $0x48] sm:$0xff]
    %v86 = vld [vmem:[#allocation6 + $0x50] sm:$0xff]
    %v87 = vld [vmem:[#allocation6 + $0x58] sm:$0xff]
    %v88 = vld [vmem:[#allocation6 + $0x60] sm:$0xff]
    %v89 = vld [vmem:[#allocation6 + $0x68] sm:$0xff]
    %v90 = vld [vmem:[#allocation6 + $0x70] sm:$0xff]
    %v91 = vld [vmem:[#allocation6 + $0x78] sm:$0xff]
    %v92 = vld [vmem:[%s2] sm:$0x1]
    %v94 = vlaneseq
    %v95 = vshrl.u32 %v94, 7
    %v96 = vsub.s32 0, %v95
    %v97 = vrot.slane %v92, %v96
    %99 = vmatprep.subr.mxu0 0.0
    %100 = vmatpush1.msra.mxu0 %v91
    %101 = vmatprep.subr.mxu0 0.0
    %102 = vmatpush1.msra.mxu0 %v90
    %103 = vmatprep.subr.mxu0 0.0
    %104 = vmatpush1.msra.mxu0 %v89
    %105 = vmatprep.subr.mxu0 0.0
    %106 = vmatpush1.msra.mxu0 %v88
    %107 = vmatprep.subr.mxu0 0.0
    %108 = vmatpush1.msra.mxu0 %v87
    %109 = vmatprep.subr.mxu0 0.0
    %110 = vmatpush1.msra.mxu0 %v86
    %111 = vmatprep.subr.mxu0 0.0
    %112 = vmatpush1.msra.mxu0 %v85
    %113 = vmatprep.subr.mxu0 0.0
    %114 = vmatpush1.msra.mxu0 %v84
    %115 = vmatprep.subr.mxu0 0.0
    %116 = vmatpush1.msra.mxu0 %v83
    %117 = vmatprep.subr.mxu0 0.0
    %118 = vmatpush1.msra.mxu0 %v82
    %119 = vmatprep.subr.mxu0 0.0
    %120 = vmatpush1.msra.mxu0 %v81
    %121 = vmatprep.subr.mxu0 0.0
    %122 = vmatpush1.msra.mxu0 %v80
    %123 = vmatprep.subr.mxu0 0.0
    %124 = vmatpush1.msra.mxu0 %v79
    %125 = vmatprep.subr.mxu0 0.0
    %126 = vmatpush1.msra.mxu0 %v78
    %127 = vmatprep.subr.mxu0 0.0
    %128 = vmatpush1.msra.mxu0 %v77
    %129 = vmatprep.subr.mxu0 0.0
    %130 = vmatpush1.msra.mxu0 %v76
    %131 = vmatprep.subr.mxu0 0.0
    %132 = vmatpush2.msra.mxu0 0.0
    %133 = vmatprep.subr.mxu0 0.0
    %134 = vmatpush2.msra.mxu0 0.0
    %135 = vmatprep.subr.mxu0 0.0
    %136 = vmatpush2.msra.mxu0 0.0
    %137 = vmatprep.subr.mxu0 0.0
    %138 = vmatpush2.msra.mxu0 0.0
    %139 = vmatprep.subr.mxu0 0.0
    %140 = vmatpush2.msra.mxu0 0.0
    %141 = vmatprep.subr.mxu0 0.0
    %142 = vmatpush2.msra.mxu0 0.0
    %143 = vmatprep.subr.mxu0 0.0
    %144 = vmatpush2.msra.mxu0 0.0
    %145 = vmatprep.subr.mxu0 0.0
    %146 = vmatpush2.msra.mxu0 0.0
    %147 = vmatprep.subr.mxu0 0.0
    %148 = vmatpush2.msra.mxu0 0.0
    %149 = vmatprep.subr.mxu0 0.0
    %150 = vmatpush2.msra.mxu0 0.0
    %151 = vmatprep.subr.mxu0 0.0
    %152 = vmatpush2.msra.mxu0 0.0
    %153 = vmatprep.subr.mxu0 0.0
    %154 = vmatpush2.msra.mxu0 0.0
    %155 = vmatprep.subr.mxu0 0.0
    %156 = vmatpush2.msra.mxu0 0.0
    %157 = vmatprep.subr.mxu0 0.0
    %158 = vmatpush2.msra.mxu0 0.0
    %159 = vmatprep.subr.mxu0 0.0
    %160 = vmatpush2.msra.mxu0 0.0
    %161 = vmatprep.subr.mxu0 0.0
    %162 = vmatpush2.msra.mxu0 0.0
    %163 = vmatprep.mubr.f32.mxu0 0.0
    %164 = vmatmul.mubr.f32.gmra.mxu0 %v74
    %v165 = vpop.f32.mrf.mxu0
    %v166 = vadd.f32 %v97, %v165
    %v167 = vpop.f32.mrf.mxu0
    %168 = vmatprep.mubr.f32.mxu0 0.0
    %169 = vmatmul.mubr.f32.gmra.mxu0 %v75
    %v170 = vpop.f32.mrf.mxu0
    %v171 = vadd.f32 %v97, %v170
    %v172 = vpop.f32.mrf.mxu0
    %173 = vdwg.mxu0
    %v174 = vmax.f32 %v166, 0.0
    %v175 = vmax.f32 %v171, 0.0
    %v176 = vld [vmem:[#allocation2] sm:$0xff]
    %v177 = vld [vmem:[#allocation2 + $0x8] sm:$0xff]
    %v178 = vld [vmem:[#allocation8] sm:$0xff]
    %v179 = vld [vmem:[#allocation8 + $0x8] sm:$0xff]
    %v180 = vld [vmem:[#allocation8 + $0x10] sm:$0xff]
    %v181 = vld [vmem:[#allocation8 + $0x18] sm:$0xff]
    %v182 = vld [vmem:[#allocation8 + $0x20] sm:$0xff]
    %v183 = vld [vmem:[#allocation8 + $0x28] sm:$0xff]
    %v184 = vld [vmem:[#allocation8 + $0x30] sm:$0xff]
    %v185 = vld [vmem:[#allocation8 + $0x38] sm:$0xff]
    %v186 = vld [vmem:[#allocation8 + $0x40] sm:$0xff]
    %v187 = vld [vmem:[#allocation8 + $0x48] sm:$0xff]
    %v188 = vld [vmem:[#allocation8 + $0x50] sm:$0xff]
    %v189 = vld [vmem:[#allocation8 + $0x58] sm:$0xff]
    %v190 = vld [vmem:[#allocation8 + $0x60] sm:$0xff]
    %v191 = vld [vmem:[#allocation8 + $0x68] sm:$0xff]
    %v192 = vld [vmem:[#allocation8 + $0x70] sm:$0xff]
    %v193 = vld [vmem:[#allocation8 + $0x78] sm:$0xff]
    %194 = vmatprep.subr.mxu0 0.0
    %195 = vmatpush1.msra.mxu0 %v193
    %196 = vmatprep.subr.mxu0 0.0
    %197 = vmatpush1.msra.mxu0 %v192
    %198 = vmatprep.subr.mxu0 0.0
    %199 = vmatpush1.msra.mxu0 %v191
    %200 = vmatprep.subr.mxu0 0.0
    %201 = vmatpush1.msra.mxu0 %v190
    %202 = vmatprep.subr.mxu0 0.0
    %203 = vmatpush1.msra.mxu0 %v189
    %204 = vmatprep.subr.mxu0 0.0
    %205 = vmatpush1.msra.mxu0 %v188
    %206 = vmatprep.subr.mxu0 0.0
    %207 = vmatpush1.msra.mxu0 %v187
    %208 = vmatprep.subr.mxu0 0.0
    %209 = vmatpush1.msra.mxu0 %v186
    %210 = vmatprep.subr.mxu0 0.0
    %211 = vmatpush1.msra.mxu0 %v185
    %212 = vmatprep.subr.mxu0 0.0
    %213 = vmatpush1.msra.mxu0 %v184
    %214 = vmatprep.subr.mxu0 0.0
    %215 = vmatpush1.msra.mxu0 %v183
    %216 = vmatprep.subr.mxu0 0.0
    %217 = vmatpush1.msra.mxu0 %v182
    %218 = vmatprep.subr.mxu0 0.0
    %219 = vmatpush1.msra.mxu0 %v181
    %220 = vmatprep.subr.mxu0 0.0
    %221 = vmatpush1.msra.mxu0 %v180
    %222 = vmatprep.subr.mxu0 0.0
    %223 = vmatpush1.msra.mxu0 %v179
    %224 = vmatprep.subr.mxu0 0.0
    %225 = vmatpush1.msra.mxu0 %v178
    %226 = vmatprep.subr.mxu0 0.0
    %227 = vmatpush2.msra.mxu0 0.0
    %228 = vmatprep.subr.mxu0 0.0
    %229 = vmatpush2.msra.mxu0 0.0
    %230 = vmatprep.subr.mxu0 0.0
    %231 = vmatpush2.msra.mxu0 0.0
    %232 = vmatprep.subr.mxu0 0.0
    %233 = vmatpush2.msra.mxu0 0.0
    %234 = vmatprep.subr.mxu0 0.0
    %235 = vmatpush2.msra.mxu0 0.0
    %236 = vmatprep.subr.mxu0 0.0
    %237 = vmatpush2.msra.mxu0 0.0
    %238 = vmatprep.subr.mxu0 0.0
    %239 = vmatpush2.msra.mxu0 0.0
    %240 = vmatprep.subr.mxu0 0.0
    %241 = vmatpush2.msra.mxu0 0.0
    %242 = vmatprep.subr.mxu0 0.0
    %243 = vmatpush2.msra.mxu0 0.0
    %244 = vmatprep.subr.mxu0 0.0
    %245 = vmatpush2.msra.mxu0 0.0
    %246 = vmatprep.subr.mxu0 0.0
    %247 = vmatpush2.msra.mxu0 0.0
    %248 = vmatprep.subr.mxu0 0.0
    %249 = vmatpush2.msra.mxu0 0.0
    %250 = vmatprep.subr.mxu0 0.0
    %251 = vmatpush2.msra.mxu0 0.0
    %252 = vmatprep.subr.mxu0 0.0
    %253 = vmatpush2.msra.mxu0 0.0
    %254 = vmatprep.subr.mxu0 0.0
    %255 = vmatpush2.msra.mxu0 0.0
    %256 = vmatprep.subr.mxu0 0.0
    %257 = vmatpush2.msra.mxu0 0.0
    %258 = vmatprep.mubr.f32.mxu0 0.0
    %259 = vmatmul.mubr.f32.gmra.mxu0 %v174
    %v260 = vpop.f32.mrf.mxu0
    %v261 = vadd.f32 0.0, %v260
    %v262 = vpop.f32.mrf.mxu0
    %263 = vmatprep.mubr.f32.mxu0 0.0
    %264 = vmatmul.mubr.f32.gmra.mxu0 %v175
    %v265 = vpop.f32.mrf.mxu0
    %v266 = vadd.f32 0.0, %v265
    %v267 = vpop.f32.mrf.mxu0
    %268 = vdwg.mxu0
    %v269 = vadd.f32 %v176, %v261
    %v270 = vadd.f32 %v177, %v266
    %271 = vst [vmem:[#allocation2] sm:$0xff] %v269
    %272 = vst [vmem:[#allocation2 + $0x8] sm:$0xff] %v270
    // Predicated region
    $region46: #{tpu_custom_call.1} parent=1 // pred_check
      %p273 = pneg %p68
    $region47: #{tpu_custom_call.1} parent=1 // pred_check_branch
      %275 = sbr.rel (%p273) target = $region49
    $region48: #{tpu_custom_call.1} parent=1 // pred_region
      %v276 = vld [vmem:[#allocation2] sm:$0xff]
      %v277 = vld [vmem:[#allocation2 + $0x8] sm:$0xff]
      %v278 = vld [vmem:[%s4] sm:$0x1]
      %v280 = vlaneseq
      %v281 = vshrl.u32 %v280, 7
      %v282 = vsub.s32 0, %v281
      %v283 = vrot.slane %v278, %v282
      %v285 = vadd.f32 %v276, %v283
      %v286 = vadd.f32 %v277, %v283
      %v287 = vadd.f32 %v74, %v285
      %v288 = vadd.f32 %v75, %v286
      %v289 = vlaneseq
      %v290 = vand.u32 %v289, 127
      %vm291 = vcmp.lt.s32.totalorder %v290, 32
      %v292 = vsel %vm291, %v287, 0.0
      %v293 = vsel %vm291, %v288, 0.0
      %294 = vadd.xlane.f32.xlu0 %v292
      %v295 = vpop.xlane.xlu0 %294
      %296 = vadd.xlane.f32.xlu0 %v293
      %v297 = vpop.xlane.xlu0 %296
      %v298 = vmul.f32 %v295, 0.03125
      %v299 = vmul.f32 %v297, 0.03125
      %v300 = vsub.f32 %v292, %v298
      %v301 = vsub.f32 %v293, %v299
      %v302 = vsel %vm291, %v300, 0.0
      %v303 = vsel %vm291, %v301, 0.0
      %v304 = vmul.f32 %v302, %v302
      %v305 = vmul.f32 %v303, %v303
      %306 = vadd.xlane.f32.xlu0 %v304
      %v307 = vpop.xlane.xlu0 %306
      %308 = vadd.xlane.f32.xlu0 %v305
      %v309 = vpop.xlane.xlu0 %308
      %v310 = vmul.f32 %v307, 0.03125
      %v311 = vmul.f32 %v309, 0.03125
      %v312 = vadd.f32 %v310, 1e-05
      %v313 = vadd.f32 %v311, 1e-05
      %v314 = vrsqrt.pop %v312
      %v315 = vrsqrt.pop %v313
      %v316 = vmul.f32 %v302, %v314
      %v317 = vmul.f32 %v303, %v315
      %v318 = vld [vmem:[%s5] sm:$0x1]
      %v320 = vlaneseq
      %v321 = vshrl.u32 %v320, 7
      %v322 = vsub.s32 0, %v321
      %v323 = vrot.slane %v318, %v322
      %v325 = vmul.f32 %v316, %v323
      %v326 = vmul.f32 %v317, %v323
      %v327 = vld [vmem:[%s6] sm:$0x1]
      %v329 = vlaneseq
      %v330 = vshrl.u32 %v329, 7
      %v331 = vsub.s32 0, %v330
      %v332 = vrot.slane %v327, %v331
      %v334 = vadd.f32 %v325, %v332
      %v335 = vadd.f32 %v326, %v332
      %336 = vst [vmem:[#allocation9] sm:$0xff] %v334
      %337 = vst [vmem:[#allocation9 + $0x8] sm:$0xff] %v335
    $region49: #{tpu_custom_call.1} parent=1 // pred_fallthru
      _
    // Predicated region
    $region50: #{tpu_custom_call.1} parent=1 // pred_check
      _
    $region51: #{tpu_custom_call.1} parent=1 // pred_check_branch
      %339 = sbr.rel (0) target = $region53
    $region52: #{tpu_custom_call.1} parent=1 // pred_region
      %s341 = ssub.s32 256, 256
      %342 = vsyncadd [#allocation5], %s341
      %s343 = sshll.u32 [#allocation9], 4
      %s344 = int_to_ptr.vmem [resolvable:$true] %s343
      %349 = dma.vmem_to_hbm [thread:$0]  %s344, 256, %s7, [#allocation5], 128, 128, 8
    $region53: #{tpu_custom_call.1} parent=1 // pred_fallthru
      _
    // Predicated region
    $region54: #{tpu_custom_call.1} parent=1 // pred_check
      _
    $region55: #{tpu_custom_call.1} parent=1 // pred_check_branch
      %351 = sbr.rel (0) target = $region57
    $region56: #{tpu_custom_call.1} parent=1 // pred_region
      %352 = dma.done [#allocation5], 256
    $region57: #{tpu_custom_call.1} parent=1 // pred_fallthru
      _
    %353 = vsyncpa [#allocation4], 1
    %354 = vsyncpa [#allocation7], 1
    %355 = vsyncpa [#allocation5], 1

</llo_original>
